<compile_context>
chip_gen: v7x
topology: tpu7x:2x2x1
jax: 0.10.0
libtpu: 0.0.40
codegen_flags: <defaults>
</compile_context>

<pallas_src>
import functools

import jax
import jax.numpy as jnp
from jax.experimental import pallas as pl
from jax.experimental.pallas import tpu as pltpu

LANES = 128
ACC_ROWS = 64                     # wide f32 accumulator (multiple of 8)
TILE_BYTES = 2 * 1024 * 1024      # ~2 MiB per input tile per grid step
NUM_SPLITS = 2                    # leading "parallel" axis (both TCs on v7x)


def _round_up(v, m):
    return ((v + m - 1) // m) * m


def _mse_kernel(x_ref, t_ref, out_ref, acc_ref, *, rows, tile_rows, acc_rows,
                steps, num_blocks, needs_mask, single_block):
    c = pl.program_id(0)          # "parallel" split axis
    i = pl.program_id(1)          # "arbitrary" reduction axis

    d = x_ref[...].astype(jnp.float32) - t_ref[...].astype(jnp.float32)
    sq = d * d

    if single_block:
        # Whole (rows, 128) view fits in one full-extent block: reduce
        # directly, no accumulator / mask needed.
        out_ref[0, 0] = jnp.sum(sq)
        return

    @pl.when(i == 0)
    def _():
        acc_ref[...] = jnp.zeros_like(acc_ref)

    def accumulate(v):
        # VPU-only accumulation into a wide (acc_rows, 128) f32 accumulator:
        # reshape splits the sublane-major axis (layout no-op); sum(axis=0)
        # is plain vreg+vreg adds with a short loop-carried chain.
        acc_ref[...] += jnp.sum(v.reshape(-1, acc_rows, LANES), axis=0)

    if needs_mask:
        # Only the globally-last block is partial; every other grid step runs
        # completely mask-free.
        is_edge = (c * steps + i) == (num_blocks - 1)

        @pl.when(jnp.logical_not(is_edge))
        def _():
            accumulate(sq)

        @pl.when(is_edge)
        def _():
            base = (c * steps + i) * tile_rows
            row_ids = base + jax.lax.broadcasted_iota(jnp.int32, sq.shape, 0)
            # select (NOT multiply) so undefined data past the array edge is
            # discarded even if it is NaN/Inf.
            accumulate(jnp.where(row_ids < rows, sq, jnp.float32(0.0)))
    else:
        accumulate(sq)

    @pl.when(i == steps - 1)
    def _():
        out_ref[0, 0] = jnp.sum(acc_ref[...])


def _sum_sq_diff(x2d, t2d):
    """Sum of (x - t)**2 over a (rows, 128) view.  Returns a f32 scalar."""
    rows = x2d.shape[0]
    itemsize = max(x2d.dtype.itemsize, t2d.dtype.itemsize)
    budget_rows = max(
        ACC_ROWS, (TILE_BYTES // (LANES * itemsize)) // ACC_ROWS * ACC_ROWS)

    if rows <= budget_rows:
        # Single full-extent block (block_shape == array dims is always legal).
        tile_rows, num_blocks = rows, 1
        single_block = True
        acc_rows = 8                      # scratch unused on this path
    else:
        single_block = False
        acc_rows = ACC_ROWS
        tile_rows = budget_rows
        num_blocks = pl.cdiv(rows, tile_rows)
        if num_blocks % NUM_SPLITS:
            # Shrink the tile so the block count is even: the 2-way core
            # split then needs no clamped / duplicated edge blocks (zero
            # extra HBM traffic on single-core chips).
            tile_rows = _round_up(pl.cdiv(rows, num_blocks + 1), ACC_ROWS)
            num_blocks = pl.cdiv(rows, tile_rows)

    num_splits = (NUM_SPLITS
                  if (not single_block and num_blocks % NUM_SPLITS == 0)
                  else 1)
    steps = num_blocks // num_splits
    needs_mask = (not single_block) and (rows % tile_rows != 0)

    kernel = functools.partial(
        _mse_kernel, rows=rows, tile_rows=tile_rows, acc_rows=acc_rows,
        steps=steps, num_blocks=num_blocks, needs_mask=needs_mask,
        single_block=single_block)

    bytes_accessed = (rows * LANES * (x2d.dtype.itemsize + t2d.dtype.itemsize)
                      + 4 * num_splits)

    partials = pl.pallas_call(
        kernel,
        out_shape=jax.ShapeDtypeStruct((num_splits, 1), jnp.float32),
        grid_spec=pltpu.PrefetchScalarGridSpec(
            num_scalar_prefetch=0,
            grid=(num_splits, steps),
            in_specs=[
                pl.BlockSpec((tile_rows, LANES), lambda c, i: (c * steps + i, 0)),
                pl.BlockSpec((tile_rows, LANES), lambda c, i: (c * steps + i, 0)),
            ],
            out_specs=pl.BlockSpec((1, 1), lambda c, i: (c, 0),
                                   memory_space=pltpu.SMEM),
            scratch_shapes=[pltpu.VMEM((acc_rows, LANES), jnp.float32)],
        ),
        compiler_params=pltpu.CompilerParams(
            dimension_semantics=("parallel", "arbitrary"),
        ),
        cost_estimate=pl.CostEstimate(
            flops=3 * rows * LANES, transcendentals=0,
            bytes_accessed=bytes_accessed),
    )(x2d, t2d)

    # Final combine of the (at most 2) per-split partial sums.
    return jnp.sum(partials)


@functools.partial(jax.jit, static_argnames=("reduction",))
def custom_mse_loss(inputs, targets, reduction="mean"):
    """Pallas equivalent of CustomMSELoss.forward (returns a scalar f32)."""
    if reduction not in ("mean", "sum"):
        raise ValueError(f"unsupported reduction: {reduction}")

    x = jnp.reshape(inputs, (-1,))
    t = jnp.reshape(targets, (-1,))
    n = x.shape[0]
    n_main = (n // LANES) * LANES

    total = jnp.float32(0.0)
    if n_main:
        # Common case n % 128 == 0: the 2-D view is a free reshape (no pad).
        # Ragged case: the 128-aligned bulk goes through the kernel (one
        # slice), the tiny tail is reduced below in plain JAX.
        xm = x if n_main == n else x[:n_main]
        tm = t if n_main == n else t[:n_main]
        total = total + _sum_sq_diff(xm.reshape(n_main // LANES, LANES),
                                     tm.reshape(n_main // LANES, LANES))
    if n_main != n:
        xt = x[n_main:].astype(jnp.float32)
        tt = t[n_main:].astype(jnp.float32)
        total = total + jnp.sum((xt - tt) ** 2)

    if reduction == "mean":
        total = total / jnp.float32(n)
    return total


if __name__ == "__main__":
    key = jax.random.PRNGKey(0)
    k1, k2, k3, k4 = jax.random.split(key, 4)

    # Small shapes consistent with typical usage (image-style predictions).
    x = jax.random.normal(k1, (2, 4, 16, 16), dtype=jnp.float32)
    y = jax.random.normal(k2, (2, 4, 16, 16), dtype=jnp.float32)

    loss_mean = jax.block_until_ready(custom_mse_loss(x, y, reduction="mean"))
    loss_sum = jax.block_until_ready(custom_mse_loss(x, y, reduction="sum"))
    ref_mean = jnp.mean((x.reshape(-1) - y.reshape(-1)) ** 2)
    ref_sum = jnp.sum((x.reshape(-1) - y.reshape(-1)) ** 2)
    assert jnp.allclose(loss_mean, ref_mean, rtol=1e-5, atol=1e-5)
    assert jnp.allclose(loss_sum, ref_sum, rtol=1e-5, atol=1e-4)

    # Larger f32 input: exercises the multi-block path (2-way parallel split,
    # even-block tile adjustment, masked partial last block, rows % 8 != 0).
    xl = jax.random.normal(k1, (71, 129, 128), dtype=jnp.float32)
    yl = jax.random.normal(k2, (71, 129, 128), dtype=jnp.float32)
    loss_l = jax.block_until_ready(custom_mse_loss(xl, yl, reduction="mean"))
    ref_l = jnp.mean((xl.reshape(-1) - yl.reshape(-1)) ** 2)
    assert jnp.allclose(loss_l, ref_l, rtol=1e-4, atol=1e-5)

    # bf16 inputs (native-dtype load + in-kernel upcast, single-block path).
    xb = jax.random.normal(k1, (3, 512, 128), dtype=jnp.bfloat16)
    yb = jax.random.normal(k2, (3, 512, 128), dtype=jnp.bfloat16)
    loss_b = jax.block_until_ready(custom_mse_loss(xb, yb, reduction="mean"))
    ref_b = jnp.mean(
        (xb.reshape(-1).astype(jnp.float32) - yb.reshape(-1).astype(jnp.float32))
        ** 2
    )
    assert jnp.allclose(loss_b, ref_b, rtol=1e-3, atol=1e-3)

    # Ragged sizes: kernel bulk + plain-JAX tail, and a tail-only tiny case.
    a = jax.random.normal(k3, (5, 301), dtype=jnp.float32)      # bulk + tail
    b = jax.random.normal(k4, (5, 301), dtype=jnp.float32)
    loss_r = jax.block_until_ready(custom_mse_loss(a, b, reduction="sum"))
    ref_r = jnp.sum((a.reshape(-1) - b.reshape(-1)) ** 2)
    assert jnp.allclose(loss_r, ref_r, rtol=1e-5, atol=1e-4)

    a2 = jax.random.normal(k3, (3, 5, 7), dtype=jnp.float32)    # tail only
    b2 = jax.random.normal(k4, (3, 5, 7), dtype=jnp.float32)
    loss_r2 = jax.block_until_ready(custom_mse_loss(a2, b2, reduction="mean"))
    ref_r2 = jnp.mean((a2.reshape(-1) - b2.reshape(-1)) ** 2)
    assert jnp.allclose(loss_r2, ref_r2, rtol=1e-5, atol=1e-5)

    print("KERNEL_OK")
</pallas_src>

<mosaic_0001>
module attributes {stable_mosaic.version = 11 : i64} {
  func.func @_mse_kernel(%arg0: i32, %arg1: i32, %arg2: memref<16x128xf32, #tpu.memory_space<vmem>>, %arg3: memref<16x128xf32, #tpu.memory_space<vmem>>, %arg4: memref<1x1xf32, #tpu.memory_space<smem>>, %arg5: memref<8x128xf32, #tpu.memory_space<vmem>>) attributes {dimension_semantics = [#tpu.dimension_semantics<parallel>, #tpu.dimension_semantics<arbitrary>], iteration_bounds = array<i64: 1, 1>, scalar_prefetch = 0 : i64, scratch_operands = 1 : i64, tpu.core_type = #tpu.core_type<tc>, window_params = [{transform_indices = @transform_0, window_bounds = array<i64: 16, 128>}, {transform_indices = @transform_1, window_bounds = array<i64: 16, 128>}, {transform_indices = @transform_2, window_bounds = array<i64: 1, 1>}]} {
    %c0 = arith.constant 0 : index
    %c0_0 = arith.constant 0 : index
    %0 = vector.load %arg2[%c0, %c0_0] : memref<16x128xf32, #tpu.memory_space<vmem>>, vector<16x128xf32>
    %c0_1 = arith.constant 0 : index
    %c0_2 = arith.constant 0 : index
    %1 = vector.load %arg3[%c0_1, %c0_2] : memref<16x128xf32, #tpu.memory_space<vmem>>, vector<16x128xf32>
    %2 = arith.subf %0, %1 : vector<16x128xf32>
    %3 = arith.mulf %2, %2 : vector<16x128xf32>
    %4 = vector.shape_cast %3 : vector<16x128xf32> to vector<1x16x128xf32>
    %cst = arith.constant dense<0.000000e+00> : vector<1xf32>
    %5 = vector.multi_reduction <add>, %4, %cst [1, 2] : vector<1x16x128xf32> to vector<1xf32>
    %6 = vector.shape_cast %5 : vector<1xf32> to vector<1x1x1xf32>
    %7 = vector.extract %6[0, 0, 0] : f32 from vector<1x1x1xf32>
    %c0_3 = arith.constant 0 : index
    %c0_4 = arith.constant 0 : index
    %8 = memref.load %arg4[%c0_3, %c0_4] : memref<1x1xf32, #tpu.memory_space<smem>>
    memref.store %7, %arg4[%c0_3, %c0_4] : memref<1x1xf32, #tpu.memory_space<smem>>
    return
  }
  func.func @transform_0(%arg0: i32, %arg1: i32) -> (i32, i32) {
    %c1_i32 = arith.constant 1 : i32
    %0 = arith.muli %arg0, %c1_i32 : i32
    %1 = arith.addi %0, %arg1 : i32
    %c0_i32 = arith.constant 0 : i32
    %c0_i32_0 = arith.constant 0 : i32
    return %1, %c0_i32 : i32, i32
  }
  func.func @transform_1(%arg0: i32, %arg1: i32) -> (i32, i32) {
    %c1_i32 = arith.constant 1 : i32
    %0 = arith.muli %arg0, %c1_i32 : i32
    %1 = arith.addi %0, %arg1 : i32
    %c0_i32 = arith.constant 0 : i32
    %c0_i32_0 = arith.constant 0 : i32
    return %1, %c0_i32 : i32, i32
  }
  func.func @transform_2(%arg0: i32, %arg1: i32) -> (i32, i32) {
    %c0_i32 = arith.constant 0 : i32
    %c0_i32_0 = arith.constant 0 : i32
    return %arg0, %c0_i32 : i32, i32
  }
}

</mosaic_0001>

<llo_original>
// kernel: custom_mse_loss.1
$region0: #{custom_mse_loss.1}
  #allocation0 [shape = 'u32[]', space=smem, size = 0x4, offset = 0x4, fixed_abs, tag = 'smem constant byte address 0x4 - core index']
  #allocation1 [shape = 'u32[144,128]{1,0:T(1,128)}', space=vmem, size = 0x12000, scoped, tag = 'internal scratch']
  #allocation2 [shape = 'f32[8,128]{1,0:T(8,128)}', space=vmem, size = 0x1000, scoped, tag = 'scratch operand']
  %s0 = inlined_call_operand.vmem [shape: f32[16,128], index: 0, kind: input, shape index: {}]
  %s1 = inlined_call_operand.vmem [shape: f32[16,128], index: 1, kind: input, shape index: {}]
  %s2 = inlined_call_operand.hbm [shape: f32[1,1], index: 2, kind: output, shape index: {}]
  %s3 = sld [smem:[#allocation0]]
  $region18: #{custom_mse_loss.1} parent=0
    _
  %s5 = ssub.s32 1, %s3
  %s6 = scalar_select 0, %s5, %s3
  $region1: #{custom_mse_loss.1} parent=0
    #allocation3 [shape = 'u8[512]{0}', space=smem, size = 0x200, scoped, tag = 'output window, operand 0, single buffered']
    #allocation4 [shape = 's32[1]{0}', space=sflag, size = 0x4, scoped, tag = 'scoped memory for custom_mse_loss.1']
    %7 = vsyncpa [#allocation4], 0
    // Predicated region
    $region2: #{custom_mse_loss.1} parent=1 // pred_check
      _
    $region3: #{custom_mse_loss.1} parent=1 // pred_check_branch
      %9 = sbr.rel (0) target = $region5
    $region4: #{custom_mse_loss.1} parent=1 // pred_region
      %s10 = sadd.s32 0, 0
      %s11 = smul.u32 2, %s10
      %p12 = scmp.lt.s32.totalorder %s11, 1
      %s13 = scalar_select %p12, %s11, 1
      %s14 = smul.addr %s13, 8
      %s15 = scalar_lea.vmem %s0, %s14
      %s16 = sadd.s32 0, 0
      %s17 = smul.u32 2, %s16
    $region5: #{custom_mse_loss.1} parent=1 // pred_fallthru
      _
    // Predicated region
    $region6: #{custom_mse_loss.1} parent=1 // pred_check
      _
    $region7: #{custom_mse_loss.1} parent=1 // pred_check_branch
      %19 = sbr.rel (0) target = $region9
    $region8: #{custom_mse_loss.1} parent=1 // pred_region
      %s20 = sadd.s32 0, 0
      %s21 = smul.u32 2, %s20
      %p22 = scmp.lt.s32.totalorder %s21, 1
      %s23 = scalar_select %p22, %s21, 1
      %s24 = smul.addr %s23, 8
      %s25 = scalar_lea.vmem %s1, %s24
      %s26 = sadd.s32 0, 0
      %s27 = smul.u32 2, %s26
    $region9: #{custom_mse_loss.1} parent=1 // pred_fallthru
      _
    %s28 = sadd.s32 0, 0
    %s29 = smul.u32 2, %s28
    %p30 = scmp.lt.s32.totalorder %s29, 1
    %s31 = scalar_select %p30, %s29, 1
    %s32 = smul.addr %s31, 8
    %s33 = scalar_lea.vmem %s0, %s32
    %s34 = sadd.s32 0, 0
    %s35 = smul.u32 2, %s34
    %p36 = scmp.lt.s32.totalorder %s35, 1
    %s37 = scalar_select %p36, %s35, 1
    %s38 = smul.addr %s37, 8
    %s39 = scalar_lea.vmem %s1, %s38
    %s40 = sadd.s32 0, 0
    %s41 = smul.u32 2, %s40
    %p42 = scmp.lt.s32.totalorder %s41, 1
    %s43 = scalar_select %p42, %s41, 1
    %s44 = smul.addr %s43, 8
    %s45 = scalar_lea.vmem %s0, %s44
    %s46 = sadd.s32 0, 0
    %s47 = smul.u32 2, %s46
    %s48 = sadd.s32 0, 0
    %s49 = smul.u32 2, %s48
    %p50 = scmp.lt.s32.totalorder %s49, 1
    %s51 = scalar_select %p50, %s49, 1
    %s52 = smul.addr %s51, 8
    %s53 = scalar_lea.vmem %s1, %s52
    %s54 = sadd.s32 0, 0
    %s55 = smul.u32 2, %s54
    %v56 = vld [vmem:[%s45] sm:$0xff]
    %v57 = vld [vmem:[%s45 + $0x8] sm:$0xff]
    %v58 = vld [vmem:[%s53] sm:$0xff]
    %v59 = vld [vmem:[%s53 + $0x8] sm:$0xff]
    %v60 = vsub.f32 %v56, %v58
    %v61 = vsub.f32 %v57, %v59
    %v62 = vmul.f32 %v60, %v60
    %v63 = vmul.f32 %v61, %v61
    %v64 = vadd.f32 %v62, %v63
    %65 = vadd.xlane.f32.xlu0 %v64
    %v66 = vpop.xlane.xlu0 %65
    %v67 = vrot.slane %v66, 4
    %v68 = vadd.f32 %v66, %v67
    %v69 = vrot.slane %v68, 2
    %v70 = vadd.f32 %v68, %v69
    %v71 = vrot.slane %v70, 1
    %v72 = vadd.f32 %v70, %v71
    %s73 = vtos %v72
    %s74 = scalar_lea.smem [#allocation3], 0
    %75 = sst [smem:[%s74]] %s73
    // Predicated region
    $region10: #{custom_mse_loss.1} parent=1 // pred_check
      _
    $region11: #{custom_mse_loss.1} parent=1 // pred_check_branch
      %77 = sbr.rel (0) target = $region13
    $region12: #{custom_mse_loss.1} parent=1 // pred_region
      %s79 = ssub.s32 16, 16
      %80 = vsyncadd [#allocation4], %s79
      %83 = dma.smem_to_hbm [#allocation3], 16, %s2, [#allocation4]
    $region13: #{custom_mse_loss.1} parent=1 // pred_fallthru
      _
    // Predicated region
    $region14: #{custom_mse_loss.1} parent=1 // pred_check
      _
    $region15: #{custom_mse_loss.1} parent=1 // pred_check_branch
      %85 = sbr.rel (0) target = $region17
    $region16: #{custom_mse_loss.1} parent=1 // pred_region
      %86 = dma.done [#allocation4], 16
    $region17: #{custom_mse_loss.1} parent=1 // pred_fallthru
      _
    %87 = sfence
    %88 = vsyncpa [#allocation4], 1

</llo_original>
